<compile_context>
chip_gen: v7x
topology: tpu7x:2x2x1
jax: 0.10.0
libtpu: 0.0.40
codegen_flags: <defaults>
</compile_context>

<pallas_src>
import functools

import jax
import jax.numpy as jnp
from jax.experimental import pallas as pl
from jax.experimental.pallas import tpu as pltpu


_DEFAULT_BLOCK_M = 512          # row tile (multiple of 8; feeds the 256x256 MXU)
_DEFAULT_BLOCK_N = 512          # intermediate tile for the streamed fallback
_VMEM_BUDGET_BYTES = 48 << 20   # conservative per-TensorCore budget (v7x: 64 MiB)


def _round_up(x, m):
    return ((x + m - 1) // m) * m


def _intermediate_kernel(x_ref, w_ref, b_ref, o_ref):
    # x_ref: [tm, H], w_ref: [H, tn], b_ref: [1, tn], o_ref: [tm, tn]
    # Matmul in native dtype (bf16-in / f32-acc is native on the MXU).
    y = jnp.dot(x_ref[...], w_ref[...], preferred_element_type=jnp.float32)
    y = y + b_ref[...].astype(jnp.float32)
    # Exact GELU: x * 0.5 * (1 + erf(x / sqrt(2))) -- matches transformers' 'gelu'.
    act = y * 0.5 * (1.0 + jax.lax.erf(y * 0.7071067811865476))
    o_ref[...] = act.astype(o_ref.dtype)


def prepare_bert_intermediate_params(weight, bias):
    """One-time parameter prep (do at load time, not per forward call).

    weight: [I, H] (PyTorch nn.Linear layout), bias: [I].
    Returns (w_t, b2d) with w_t: [H, I_pad], b2d: [1, I_pad]; I_pad is the
    intermediate dim rounded up to a lane multiple (128) -- independent of the
    runtime block sizes.
    """
    I, H = weight.shape
    I_pad = _round_up(I, 128)
    w_t = jnp.asarray(weight).T                      # [H, I]
    b = jnp.asarray(bias)
    if I_pad != I:
        w_t = jnp.pad(w_t, ((0, 0), (0, I_pad - I)))
        b = jnp.pad(b, (0, I_pad - I))
    return w_t, b.reshape(1, I_pad)


def _resident_vmem_bytes(tm, H, I_pad, itemsize):
    # Weight/bias have a constant block index, so they are DMA'd once, but we
    # budget 2 buffers for them (pipeline allocation) to stay conservative.
    return (2 * H * I_pad * itemsize          # resident weight (worst case 2 bufs)
            + 2 * I_pad * itemsize            # bias
            + 2 * tm * H * itemsize           # double-buffered x tiles
            + 2 * tm * I_pad * itemsize       # double-buffered out tiles
            + 3 * tm * I_pad * 4)             # f32 epilogue temporaries


def _streamed_vmem_bytes(tm, tn, H, itemsize):
    return (2 * (tm * H + H * tn + tn + tm * tn) * itemsize
            + 3 * tm * tn * 4)                # f32 epilogue temporaries


@functools.partial(jax.jit, static_argnames=("out_dim", "block_m", "block_n"))
def bert_intermediate(hidden_states, w_t, b2d, *, out_dim,
                      block_m=_DEFAULT_BLOCK_M, block_n=_DEFAULT_BLOCK_N):
    """hidden_states: [B, S, H]; w_t: [H, I_pad]; b2d: [1, I_pad]; out_dim = true I."""
    B, S, H = hidden_states.shape
    Hw, I_pad = w_t.shape
    assert Hw == H, "weight hidden dim mismatch"

    M = B * S
    x2d = hidden_states.reshape(M, H)
    dtype = hidden_states.dtype
    itemsize = jnp.dtype(dtype).itemsize

    # Row tile: multiple of 8, no wrapper-side padding (Pallas masks the
    # partial last block of the grid).
    tm = min(block_m, _round_up(M, 8))

    # ---- Layout A (preferred): weight fully VMEM-resident, tile only M. ----
    tm_res = tm
    while tm_res > 8 and _resident_vmem_bytes(tm_res, H, I_pad, itemsize) > _VMEM_BUDGET_BYTES:
        tm_res = max(8, _round_up(tm_res // 2, 8))
    use_resident = _resident_vmem_bytes(tm_res, H, I_pad, itemsize) <= _VMEM_BUDGET_BYTES

    if use_resident:
        tm = tm_res
        grid = (pl.cdiv(M, tm),)
        in_specs = [
            pl.BlockSpec((tm, H), lambda i: (i, 0)),        # x row tile
            pl.BlockSpec((H, I_pad), lambda i: (0, 0)),     # resident weight: DMA'd once
            pl.BlockSpec((1, I_pad), lambda i: (0, 0)),     # resident bias
        ]
        out_specs = pl.BlockSpec((tm, I_pad), lambda i: (i, 0))
        dims = ("parallel",)
        vmem_need = _resident_vmem_bytes(tm, H, I_pad, itemsize)
        bytes_accessed = (M * H + H * I_pad + I_pad + M * I_pad) * itemsize
    else:
        # ---- Layout B (fallback): stream the weight with N on the OUTER (slow)
        # grid axis so each weight tile stays put across the inner M sweep and
        # only the smaller x tiles re-stream.
        tn = min(block_n, I_pad)
        while tn > 128 and _streamed_vmem_bytes(tm, tn, H, itemsize) > _VMEM_BUDGET_BYTES:
            tn = max(128, _round_up(tn // 2, 128))
        while tm > 8 and _streamed_vmem_bytes(tm, tn, H, itemsize) > _VMEM_BUDGET_BYTES:
            tm = max(8, _round_up(tm // 2, 8))
        grid_n = pl.cdiv(I_pad, tn)
        grid = (grid_n, pl.cdiv(M, tm))
        in_specs = [
            pl.BlockSpec((tm, H), lambda j, i: (i, 0)),     # x re-streams per j
            pl.BlockSpec((H, tn), lambda j, i: (0, j)),     # weight tile held over inner i
            pl.BlockSpec((1, tn), lambda j, i: (0, j)),
        ]
        out_specs = pl.BlockSpec((tm, tn), lambda j, i: (i, j))
        dims = ("parallel", "parallel")
        vmem_need = _streamed_vmem_bytes(tm, tn, H, itemsize)
        bytes_accessed = (grid_n * M * H + H * I_pad + I_pad + M * I_pad) * itemsize

    cost = pl.CostEstimate(
        flops=2 * M * H * I_pad,
        transcendentals=M * I_pad,
        bytes_accessed=int(bytes_accessed),
    )
    vmem_limit = int(min(max(vmem_need + (4 << 20), 32 << 20), 64 << 20))

    out2d = pl.pallas_call(
        _intermediate_kernel,
        out_shape=jax.ShapeDtypeStruct((M, I_pad), dtype),
        grid_spec=pltpu.PrefetchScalarGridSpec(
            num_scalar_prefetch=0,
            grid=grid,
            in_specs=in_specs,
            out_specs=out_specs,
        ),
        compiler_params=pltpu.CompilerParams(
            dimension_semantics=dims,
            vmem_limit_bytes=vmem_limit,
        ),
        cost_estimate=cost,
    )(x2d, w_t, b2d)

    if I_pad != out_dim:
        out2d = out2d[:, :out_dim]
    return out2d.reshape(B, S, out_dim)


def _reference(hidden_states, weight, bias):
    y = jnp.einsum("bsh,ih->bsi", hidden_states, weight) + bias
    return y * 0.5 * (1.0 + jax.lax.erf(y / jnp.sqrt(2.0)))


if __name__ == "__main__":
    # Small config consistent with the module: hidden_size=32, intermediate_size=128
    B, S, H, I = 2, 8, 32, 128

    key = jax.random.PRNGKey(0)
    kx, kw, kb = jax.random.split(key, 3)
    x = jax.random.normal(kx, (B, S, H), dtype=jnp.float32)
    weight = jax.random.normal(kw, (I, H), dtype=jnp.float32) * (1.0 / jnp.sqrt(H))
    bias = jax.random.normal(kb, (I,), dtype=jnp.float32) * 0.02

    # One-time parameter prep (transpose + lane padding) hoisted out of the call path.
    w_t, b2d = prepare_bert_intermediate_params(weight, bias)

    out = bert_intermediate(x, w_t, b2d, out_dim=I)
    out = jax.block_until_ready(out)

    ref = _reference(x, weight, bias)
    assert out.shape == (B, S, I)
    assert jnp.allclose(out, ref, atol=1e-5, rtol=1e-5), "mismatch vs reference"

    print("KERNEL_OK")
</pallas_src>

<mosaic_0001>
module attributes {stable_mosaic.version = 11 : i64} {
  func.func @_intermediate_kernel(%arg0: i32, %arg1: memref<16x32xf32, #tpu.memory_space<vmem>>, %arg2: memref<32x128xf32, #tpu.memory_space<vmem>>, %arg3: memref<1x128xf32, #tpu.memory_space<vmem>>, %arg4: memref<16x128xf32, #tpu.memory_space<vmem>>) attributes {dimension_semantics = [#tpu.dimension_semantics<parallel>], iteration_bounds = array<i64: 1>, scalar_prefetch = 0 : i64, scratch_operands = 0 : i64, tpu.core_type = #tpu.core_type<tc>, window_params = [{transform_indices = @transform_0, window_bounds = array<i64: 16, 32>}, {pipeline_mode = #tpu.pipeline_mode<synchronous>, transform_indices = @transform_1, window_bounds = array<i64: 32, 128>}, {pipeline_mode = #tpu.pipeline_mode<synchronous>, transform_indices = @transform_2, window_bounds = array<i64: 1, 128>}, {transform_indices = @transform_3, window_bounds = array<i64: 16, 128>}]} {
    %c0 = arith.constant 0 : index
    %c0_0 = arith.constant 0 : index
    %0 = vector.load %arg1[%c0, %c0_0] : memref<16x32xf32, #tpu.memory_space<vmem>>, vector<16x32xf32>
    %c0_1 = arith.constant 0 : index
    %c0_2 = arith.constant 0 : index
    %1 = vector.load %arg2[%c0_1, %c0_2] : memref<32x128xf32, #tpu.memory_space<vmem>>, vector<32x128xf32>
    %cst = arith.constant dense<0.000000e+00> : vector<16x128xf32>
    %2 = tpu.matmul %0, %1, %cst {dimension_numbers = #tpu.dot_dimension_numbers<[1], [0], [0], [1], [0, 0, 1, 1], [], []>} : vector<16x32xf32>, vector<32x128xf32>, vector<16x128xf32> -> vector<16x128xf32>
    %c0_3 = arith.constant 0 : index
    %c0_4 = arith.constant 0 : index
    %3 = vector.load %arg3[%c0_3, %c0_4] : memref<1x128xf32, #tpu.memory_space<vmem>>, vector<1x128xf32>
    %4 = vector.broadcast %3 : vector<1x128xf32> to vector<16x128xf32>
    %5 = arith.addf %2, %4 : vector<16x128xf32>
    %cst_5 = arith.constant 5.000000e-01 : f32
    %6 = vector.broadcast %cst_5 : f32 to vector<16x128xf32>
    %7 = arith.mulf %5, %6 : vector<16x128xf32>
    %cst_6 = arith.constant 0.707106769 : f32
    %8 = vector.broadcast %cst_6 : f32 to vector<16x128xf32>
    %9 = arith.mulf %5, %8 : vector<16x128xf32>
    %10 = math.erf %9 : vector<16x128xf32>
    %cst_7 = arith.constant 1.000000e+00 : f32
    %11 = vector.broadcast %cst_7 : f32 to vector<16x128xf32>
    %12 = arith.addf %11, %10 : vector<16x128xf32>
    %13 = arith.mulf %7, %12 : vector<16x128xf32>
    %c0_8 = arith.constant 0 : index
    %c0_9 = arith.constant 0 : index
    %14 = vector.load %arg4[%c0_8, %c0_9] : memref<16x128xf32, #tpu.memory_space<vmem>>, vector<16x128xf32>
    tpu.vector_store %arg4[%c0_8, %c0_9], %13 {strides = array<i32>} : memref<16x128xf32, #tpu.memory_space<vmem>>, vector<16x128xf32>,
    return
  }
  func.func @transform_0(%arg0: i32) -> (i32, i32) {
    %c0_i32 = arith.constant 0 : i32
    %c0_i32_0 = arith.constant 0 : i32
    return %arg0, %c0_i32 : i32, i32
  }
  func.func @transform_1(%arg0: i32) -> (i32, i32) {
    %c0_i32 = arith.constant 0 : i32
    %c0_i32_0 = arith.constant 0 : i32
    %c0_i32_1 = arith.constant 0 : i32
    return %c0_i32, %c0_i32_0 : i32, i32
  }
  func.func @transform_2(%arg0: i32) -> (i32, i32) {
    %c0_i32 = arith.constant 0 : i32
    %c0_i32_0 = arith.constant 0 : i32
    %c0_i32_1 = arith.constant 0 : i32
    return %c0_i32, %c0_i32_0 : i32, i32
  }
  func.func @transform_3(%arg0: i32) -> (i32, i32) {
    %c0_i32 = arith.constant 0 : i32
    %c0_i32_0 = arith.constant 0 : i32
    return %arg0, %c0_i32 : i32, i32
  }
}

</mosaic_0001>

<llo_original>
// kernel: bert_intermediate.1
$region0: #{bert_intermediate.1}
  #allocation0 [shape = 'u32[]', space=smem, size = 0x4, offset = 0x4, fixed_abs, tag = 'smem constant byte address 0x4 - core index']
  #allocation1 [shape = 'u32[144,128]{1,0:T(1,128)}', space=vmem, size = 0x12000, scoped, tag = 'internal scratch']
  %s0 = inlined_call_operand.hbm [shape: f32[16,32], index: 0, kind: input, shape index: {}]
  %s1 = inlined_call_operand.hbm [shape: f32[32,128], index: 1, kind: input, shape index: {}]
  %s2 = inlined_call_operand.vmem [shape: f32[1,128], index: 2, kind: input, shape index: {}]
  %s3 = inlined_call_operand.hbm [shape: f32[16,128], index: 3, kind: output, shape index: {}]
  %s4 = sld [smem:[#allocation0]]
  $region30: #{bert_intermediate.1} parent=0
    _
  %s6 = ssub.s32 1, %s4
  %s7 = scalar_select 0, %s6, %s4
  $region1: #{bert_intermediate.1} parent=0
    #allocation2 [shape = 'u8[8192]{0}', space=vmem, size = 0x2000, scoped, tag = 'input window, operand 0, single buffered']
    #allocation3 [shape = 's32[1]{0}', space=sflag, size = 0x4, scoped, tag = 'scoped memory for bert_intermediate.1']
    #allocation4 [shape = 's32[1]{0}', space=sflag, size = 0x4, scoped, tag = 'scoped memory for bert_intermediate.1']
    #allocation5 [shape = 'u8[16384]{0}', space=vmem, size = 0x4000, scoped, tag = 'input window, operand 1, single buffered']
    #allocation6 [shape = 's32[1]{0}', space=sflag, size = 0x4, scoped, tag = 'scoped memory for bert_intermediate.1']
    #allocation7 [shape = 'u8[8192]{0}', space=vmem, size = 0x2000, scoped, tag = 'output window, operand 0, single buffered']
    %8 = vsyncpa [#allocation3], 0
    %9 = vsyncpa [#allocation6], 0
    %10 = vsyncpa [#allocation4], 0
    // Predicated region
    $region2: #{bert_intermediate.1} parent=1 // pred_check
      _
    $region3: #{bert_intermediate.1} parent=1 // pred_check_branch
      %12 = sbr.rel (0) target = $region5
    $region4: #{bert_intermediate.1} parent=1 // pred_region
      %s14 = ssub.s32 256, 256
      %15 = vsyncadd [#allocation3], %s14
      %s16 = sshll.u32 [#allocation2], 4
      %s17 = int_to_ptr.vmem [resolvable:$true] %s16
      %22 = dma.hbm_to_vmem [thread:$0]  %s0, 256, %s17, [#allocation3], 128, 128, 8
    $region5: #{bert_intermediate.1} parent=1 // pred_fallthru
      _
    // Predicated region
    $region6: #{bert_intermediate.1} parent=1 // pred_check
      _
    $region7: #{bert_intermediate.1} parent=1 // pred_check_branch
      %24 = sbr.rel (0) target = $region9
    $region8: #{bert_intermediate.1} parent=1 // pred_region
      %s26 = ssub.s32 512, 512
      %27 = vsyncadd [#allocation6], %s26
      %s28 = sshll.u32 [#allocation5], 4
      %s29 = int_to_ptr.vmem [resolvable:$true] %s28
      %34 = dma.hbm_to_vmem [thread:$0]  %s1, 512, %s29, [#allocation6], 128, 128, 8
    $region9: #{bert_intermediate.1} parent=1 // pred_fallthru
      _
    // Predicated region
    $region10: #{bert_intermediate.1} parent=1 // pred_check
      _
    $region11: #{bert_intermediate.1} parent=1 // pred_check_branch
      %36 = sbr.rel (0) target = $region13
    $region12: #{bert_intermediate.1} parent=1 // pred_region
      _
    $region13: #{bert_intermediate.1} parent=1 // pred_fallthru
      _
    // Predicated region
    $region14: #{bert_intermediate.1} parent=1 // pred_check
      _
    $region15: #{bert_intermediate.1} parent=1 // pred_check_branch
      %38 = sbr.rel (0) target = $region17
    $region16: #{bert_intermediate.1} parent=1 // pred_region
      %39 = dma.done [#allocation3], 256
    $region17: #{bert_intermediate.1} parent=1 // pred_fallthru
      _
    // Predicated region
    $region18: #{bert_intermediate.1} parent=1 // pred_check
      _
    $region19: #{bert_intermediate.1} parent=1 // pred_check_branch
      %41 = sbr.rel (0) target = $region21
    $region20: #{bert_intermediate.1} parent=1 // pred_region
      %42 = dma.done [#allocation6], 512
    $region21: #{bert_intermediate.1} parent=1 // pred_fallthru
      _
    %v43 = vld [vmem:[#allocation2] sm:$0xff]
    %v44 = vld [vmem:[#allocation2 + $0x8] sm:$0xff]
    %v45 = vld [vmem:[#allocation5] sm:$0xff]
    %v46 = vld [vmem:[#allocation5 + $0x8] sm:$0xff]
    %v47 = vld [vmem:[#allocation5 + $0x10] sm:$0xff]
    %v48 = vld [vmem:[#allocation5 + $0x18] sm:$0xff]
    %v49 = vld [vmem:[%s2] sm:$0x1]
    %v51 = vlaneseq
    %v52 = vshrl.u32 %v51, 7
    %v53 = vsub.s32 0, %v52
    %v54 = vrot.slane %v49, %v53
    %vm56 = vcmask 261120
    %v58 = vsel %vm56, %v43, 0
    %v61 = vsel %vm56, %v44, 0
    %63 = vmatprep.subr.mxu0 0.0
    %64 = vmatpush1.msra.mxu0 %v45
    %65 = vmatprep.subr.mxu0 0.0
    %66 = vmatpush1.msra.mxu0 %v46
    %67 = vmatprep.subr.mxu0 0.0
    %68 = vmatpush1.msra.mxu0 %v47
    %69 = vmatprep.subr.mxu0 0.0
    %70 = vmatpush1.msra.mxu0 %v48
    %71 = vmatprep.subr.mxu0 0.0
    %72 = vmatpush1.msra.mxu0 0.0
    %73 = vmatprep.subr.mxu0 0.0
    %74 = vmatpush1.msra.mxu0 0.0
    %75 = vmatprep.subr.mxu0 0.0
    %76 = vmatpush1.msra.mxu0 0.0
    %77 = vmatprep.subr.mxu0 0.0
    %78 = vmatpush1.msra.mxu0 0.0
    %79 = vmatprep.subr.mxu0 0.0
    %80 = vmatpush1.msra.mxu0 0.0
    %81 = vmatprep.subr.mxu0 0.0
    %82 = vmatpush1.msra.mxu0 0.0
    %83 = vmatprep.subr.mxu0 0.0
    %84 = vmatpush1.msra.mxu0 0.0
    %85 = vmatprep.subr.mxu0 0.0
    %86 = vmatpush1.msra.mxu0 0.0
    %87 = vmatprep.subr.mxu0 0.0
    %88 = vmatpush1.msra.mxu0 0.0
    %89 = vmatprep.subr.mxu0 0.0
    %90 = vmatpush1.msra.mxu0 0.0
    %91 = vmatprep.subr.mxu0 0.0
    %92 = vmatpush1.msra.mxu0 0.0
    %93 = vmatprep.subr.mxu0 0.0
    %94 = vmatpush1.msra.mxu0 0.0
    %95 = vmatprep.subr.mxu0 0.0
    %96 = vmatpush1.msra.mxu0 0.0
    %97 = vmatprep.subr.mxu0 0.0
    %98 = vmatpush1.msra.mxu0 0.0
    %99 = vmatprep.subr.mxu0 0.0
    %100 = vmatpush1.msra.mxu0 0.0
    %101 = vmatprep.subr.mxu0 0.0
    %102 = vmatpush1.msra.mxu0 0.0
    %103 = vmatprep.subr.mxu0 0.0
    %104 = vmatpush1.msra.mxu0 0.0
    %105 = vmatprep.subr.mxu0 0.0
    %106 = vmatpush1.msra.mxu0 0.0
    %107 = vmatprep.subr.mxu0 0.0
    %108 = vmatpush1.msra.mxu0 0.0
    %109 = vmatprep.subr.mxu0 0.0
    %110 = vmatpush1.msra.mxu0 0.0
    %111 = vmatprep.subr.mxu0 0.0
    %112 = vmatpush1.msra.mxu0 0.0
    %113 = vmatprep.subr.mxu0 0.0
    %114 = vmatpush1.msra.mxu0 0.0
    %115 = vmatprep.subr.mxu0 0.0
    %116 = vmatpush1.msra.mxu0 0.0
    %117 = vmatprep.subr.mxu0 0.0
    %118 = vmatpush1.msra.mxu0 0.0
    %119 = vmatprep.subr.mxu0 0.0
    %120 = vmatpush1.msra.mxu0 0.0
    %121 = vmatprep.subr.mxu0 0.0
    %122 = vmatpush1.msra.mxu0 0.0
    %123 = vmatprep.subr.mxu0 0.0
    %124 = vmatpush1.msra.mxu0 0.0
    %125 = vmatprep.subr.mxu0 0.0
    %126 = vmatpush1.msra.mxu0 0.0
    %127 = vmatprep.mubr.f32.mxu0 0.0
    %128 = vmatmul.mubr.f32.gmra.mrb[0].mxu0 %v58
    %v129 = vpop.f32.mrb[0].mxu0
    %v130 = vadd.f32 %v54, %v129
    %v131 = vpop.f32.mrb[0].mxu0
    %132 = vmatprep.mubr.f32.mxu0 0.0
    %133 = vmatmul.mubr.f32.gmra.mrb[0].mxu0 %v61
    %v134 = vpop.f32.mrb[0].mxu0
    %v135 = vadd.f32 %v54, %v134
    %v136 = vpop.f32.mrb[0].mxu0
    %137 = vdwg.mxu0
    %v138 = vmul.f32 %v130, 0.5
    %v139 = vmul.f32 %v135, 0.5
    %v140 = vmul.f32 %v130, 0.70710677
    %v141 = vmul.f32 %v135, 0.70710677
    %v142 = verf.f32.pop %v140
    %v143 = verf.f32.pop %v141
    %v144 = vadd.f32 %v142, 1.0
    %v145 = vadd.f32 %v143, 1.0
    %v146 = vmul.f32 %v138, %v144
    %v147 = vmul.f32 %v139, %v145
    %148 = vst [vmem:[#allocation7] sm:$0xff] %v146
    %149 = vst [vmem:[#allocation7 + $0x8] sm:$0xff] %v147
    // Predicated region
    $region22: #{bert_intermediate.1} parent=1 // pred_check
      _
    $region23: #{bert_intermediate.1} parent=1 // pred_check_branch
      %151 = sbr.rel (0) target = $region25
    $region24: #{bert_intermediate.1} parent=1 // pred_region
      %s153 = ssub.s32 256, 256
      %154 = vsyncadd [#allocation4], %s153
      %s155 = sshll.u32 [#allocation7], 4
      %s156 = int_to_ptr.vmem [resolvable:$true] %s155
      %161 = dma.vmem_to_hbm [thread:$0]  %s156, 256, %s3, [#allocation4], 128, 128, 8
    $region25: #{bert_intermediate.1} parent=1 // pred_fallthru
      _
    // Predicated region
    $region26: #{bert_intermediate.1} parent=1 // pred_check
      _
    $region27: #{bert_intermediate.1} parent=1 // pred_check_branch
      %163 = sbr.rel (0) target = $region29
    $region28: #{bert_intermediate.1} parent=1 // pred_region
      %164 = dma.done [#allocation4], 256
    $region29: #{bert_intermediate.1} parent=1 // pred_fallthru
      _
    %165 = vsyncpa [#allocation3], 1
    %166 = vsyncpa [#allocation6], 1
    %167 = vsyncpa [#allocation4], 1

</llo_original>
